<compile_context>
chip_gen: v7x
topology: tpu7x:2x2x1
jax: 0.10.0
libtpu: 0.0.40
codegen_flags: <defaults>
</compile_context>

<pallas_src>
import jax
import jax.numpy as jnp
from jax.experimental import pallas as pl
from jax.experimental.pallas import tpu as pltpu

_LANE = 128
_SUBLANE = 8


def _round_up(n, m):
    return ((n + m - 1) // m) * m


def mlp_kernel(x_ref, w1_ref, b1_ref, w2_ref, b2_ref, w3_ref, b3_ref, o_ref):
    # Layer 1: (bm, in) @ (in, 16) on MXU (bf16 or f32 operands, f32 accumulate)
    h1 = jnp.dot(x_ref[...], w1_ref[...], preferred_element_type=jnp.float32)
    h1 = jnp.maximum(h1 + b1_ref[...], 0.0)
    # Layer 2: (bm, 16) @ (16, 8), f32
    h2 = jnp.dot(h1, w2_ref[...], preferred_element_type=jnp.float32)
    h2 = jnp.maximum(h2 + b2_ref[...], 0.0)
    # Layer 3: (bm, 8) @ (8, out_pad), f32; padded columns are exactly zero.
    h3 = jnp.dot(h2, w3_ref[...], preferred_element_type=jnp.float32)
    o_ref[...] = jnp.maximum(h3 + b3_ref[...], 0.0).astype(o_ref.dtype)
    # TODO(synk): if bm is pushed past ~2048 (esp. on v7x's 64 MiB VMEM), chunk
    # the body with an unrolled lax.fori_loop over 256-row sub-slices to bound
    # the lane-padded h1/h2 vreg footprint.


def interchange_ann(x, params, *, bm=512, cast_input_bf16=True):
    """x: (B, in_dims) f32. params: dict of w1,b1,w2,b2,w3,b3 (weights stored (in,out))."""
    B, in_dims = x.shape
    out_dims = params["w3"].shape[1]

    # Row tile: as large as possible (amortizes per-step overhead, fills MXU
    # rows) but never larger than the sublane-rounded batch.
    bm = max(_SUBLANE, min(_round_up(bm, _SUBLANE), _round_up(B, _SUBLANE)))
    B_pad = _round_up(B, bm)
    if B_pad != B:
        x = jnp.pad(x, ((0, B_pad - B), (0, 0)))

    # Lane-dense output: pad out features to a multiple of 128.
    out_pad = _round_up(out_dims, _LANE)
    w3, b3 = params["w3"], params["b3"]
    if out_pad != out_dims:
        w3 = jnp.pad(w3, ((0, 0), (0, out_pad - out_dims)))
        b3 = jnp.pad(b3, ((0, 0), (0, out_pad - out_dims)))

    # bf16 streaming input (the dominant HBM traffic); accumulation is f32.
    w1 = params["w1"]
    if cast_input_bf16:
        x = x.astype(jnp.bfloat16)
        w1 = w1.astype(jnp.bfloat16)

    grid = (B_pad // bm,)

    def full(arr):  # whole-array block, constant index -> fetched once
        return pl.BlockSpec(arr.shape, lambda i: (0,) * arr.ndim)

    out = pl.pallas_call(
        mlp_kernel,
        out_shape=jax.ShapeDtypeStruct((B_pad, out_pad), jnp.float32),
        grid_spec=pltpu.PrefetchScalarGridSpec(
            num_scalar_prefetch=0,
            grid=grid,
            in_specs=[
                pl.BlockSpec((bm, in_dims), lambda i: (i, 0)),  # x row tile
                full(w1), full(params["b1"]),
                full(params["w2"]), full(params["b2"]),
                full(w3), full(b3),
            ],
            out_specs=pl.BlockSpec((bm, out_pad), lambda i: (i, 0)),
        ),
        compiler_params=pltpu.CompilerParams(
            dimension_semantics=("parallel",),  # shards across TCs on v7x
        ),
    )(x, w1, params["b1"], params["w2"], params["b2"], w3, b3)

    return out[:B, :out_dims]


def init_params(key, in_dims, out_dims):
    """Deterministic init mirroring nn.Linear's U(-1/sqrt(fan_in), 1/sqrt(fan_in))."""
    dims = [(in_dims, 16), (16, 8), (8, out_dims)]
    params = {}
    for idx, (fi, fo) in enumerate(dims, start=1):
        key, kw, kb = jax.random.split(key, 3)
        bound = 1.0 / jnp.sqrt(fi)
        # stored (in, out) == torch weight (out, in) transposed
        params[f"w{idx}"] = jax.random.uniform(kw, (fi, fo), jnp.float32, -bound, bound)
        params[f"b{idx}"] = jax.random.uniform(kb, (1, fo), jnp.float32, -bound, bound)
    return params


def reference(x, p):
    h = jnp.maximum(x @ p["w1"] + p["b1"], 0.0)
    h = jnp.maximum(h @ p["w2"] + p["b2"], 0.0)
    return jnp.maximum(h @ p["w3"] + p["b3"], 0.0)


if __name__ == "__main__":
    key = jax.random.PRNGKey(0)
    in_dims, out_dims, batch = 32, 4, 16

    kx, kp = jax.random.split(key)
    x = jax.random.normal(kx, (batch, in_dims), jnp.float32)
    params = init_params(kp, in_dims, out_dims)

    ref = reference(x, params)

    # f32 path: bit-for-bit comparable to the reference.
    out_f32 = jax.block_until_ready(
        interchange_ann(x, params, bm=512, cast_input_bf16=False))
    assert out_f32.shape == (batch, out_dims)
    assert jnp.allclose(out_f32, ref, atol=1e-5, rtol=1e-5), "f32 mismatch vs reference"

    # bf16-input fast path (default): looser tolerance from input rounding.
    out_bf16 = jax.block_until_ready(interchange_ann(x, params, bm=512))
    assert out_bf16.shape == (batch, out_dims)
    assert jnp.allclose(out_bf16, ref, atol=5e-2, rtol=5e-2), "bf16 mismatch vs reference"

    print("KERNEL_OK")
</pallas_src>

<mosaic_0001>
module attributes {stable_mosaic.version = 11 : i64} {
  func.func @mlp_kernel(%arg0: i32, %arg1: memref<16x32xf32, #tpu.memory_space<vmem>>, %arg2: memref<32x16xf32, #tpu.memory_space<vmem>>, %arg3: memref<1x16xf32, #tpu.memory_space<vmem>>, %arg4: memref<16x8xf32, #tpu.memory_space<vmem>>, %arg5: memref<1x8xf32, #tpu.memory_space<vmem>>, %arg6: memref<8x128xf32, #tpu.memory_space<vmem>>, %arg7: memref<1x128xf32, #tpu.memory_space<vmem>>, %arg8: memref<16x128xf32, #tpu.memory_space<vmem>>) attributes {dimension_semantics = [#tpu.dimension_semantics<parallel>], iteration_bounds = array<i64: 1>, scalar_prefetch = 0 : i64, scratch_operands = 0 : i64, tpu.core_type = #tpu.core_type<tc>, window_params = [{transform_indices = @transform_0, window_bounds = array<i64: 16, 32>}, {pipeline_mode = #tpu.pipeline_mode<synchronous>, transform_indices = @transform_1, window_bounds = array<i64: 32, 16>}, {pipeline_mode = #tpu.pipeline_mode<synchronous>, transform_indices = @transform_2, window_bounds = array<i64: 1, 16>}, {pipeline_mode = #tpu.pipeline_mode<synchronous>, transform_indices = @transform_3, window_bounds = array<i64: 16, 8>}, {pipeline_mode = #tpu.pipeline_mode<synchronous>, transform_indices = @transform_4, window_bounds = array<i64: 1, 8>}, {pipeline_mode = #tpu.pipeline_mode<synchronous>, transform_indices = @transform_5, window_bounds = array<i64: 8, 128>}, {pipeline_mode = #tpu.pipeline_mode<synchronous>, transform_indices = @transform_6, window_bounds = array<i64: 1, 128>}, {transform_indices = @transform_7, window_bounds = array<i64: 16, 128>}]} {
    %c0 = arith.constant 0 : index
    %c0_0 = arith.constant 0 : index
    %0 = vector.load %arg1[%c0, %c0_0] : memref<16x32xf32, #tpu.memory_space<vmem>>, vector<16x32xf32>
    %c0_1 = arith.constant 0 : index
    %c0_2 = arith.constant 0 : index
    %1 = vector.load %arg2[%c0_1, %c0_2] : memref<32x16xf32, #tpu.memory_space<vmem>>, vector<32x16xf32>
    %cst = arith.constant dense<0.000000e+00> : vector<16x16xf32>
    %2 = tpu.matmul %0, %1, %cst {dimension_numbers = #tpu.dot_dimension_numbers<[1], [0], [0], [1], [0, 0, 1, 1], [], []>} : vector<16x32xf32>, vector<32x16xf32>, vector<16x16xf32> -> vector<16x16xf32>
    %c0_3 = arith.constant 0 : index
    %c0_4 = arith.constant 0 : index
    %3 = vector.load %arg3[%c0_3, %c0_4] : memref<1x16xf32, #tpu.memory_space<vmem>>, vector<1x16xf32>
    %4 = vector.broadcast %3 : vector<1x16xf32> to vector<16x16xf32>
    %5 = arith.addf %2, %4 : vector<16x16xf32>
    %cst_5 = arith.constant 0.000000e+00 : f32
    %6 = vector.broadcast %cst_5 : f32 to vector<16x16xf32>
    %7 = arith.maximumf %5, %6 : vector<16x16xf32>
    %c0_6 = arith.constant 0 : index
    %c0_7 = arith.constant 0 : index
    %8 = vector.load %arg4[%c0_6, %c0_7] : memref<16x8xf32, #tpu.memory_space<vmem>>, vector<16x8xf32>
    %cst_8 = arith.constant dense<0.000000e+00> : vector<16x8xf32>
    %9 = tpu.matmul %7, %8, %cst_8 {dimension_numbers = #tpu.dot_dimension_numbers<[1], [0], [0], [1], [0, 0, 1, 1], [], []>} : vector<16x16xf32>, vector<16x8xf32>, vector<16x8xf32> -> vector<16x8xf32>
    %c0_9 = arith.constant 0 : index
    %c0_10 = arith.constant 0 : index
    %10 = vector.load %arg5[%c0_9, %c0_10] : memref<1x8xf32, #tpu.memory_space<vmem>>, vector<1x8xf32>
    %11 = vector.broadcast %10 : vector<1x8xf32> to vector<16x8xf32>
    %12 = arith.addf %9, %11 : vector<16x8xf32>
    %cst_11 = arith.constant 0.000000e+00 : f32
    %13 = vector.broadcast %cst_11 : f32 to vector<16x8xf32>
    %14 = arith.maximumf %12, %13 : vector<16x8xf32>
    %c0_12 = arith.constant 0 : index
    %c0_13 = arith.constant 0 : index
    %15 = vector.load %arg6[%c0_12, %c0_13] : memref<8x128xf32, #tpu.memory_space<vmem>>, vector<8x128xf32>
    %cst_14 = arith.constant dense<0.000000e+00> : vector<16x128xf32>
    %16 = tpu.matmul %14, %15, %cst_14 {dimension_numbers = #tpu.dot_dimension_numbers<[1], [0], [0], [1], [0, 0, 1, 1], [], []>} : vector<16x8xf32>, vector<8x128xf32>, vector<16x128xf32> -> vector<16x128xf32>
    %c0_15 = arith.constant 0 : index
    %c0_16 = arith.constant 0 : index
    %17 = vector.load %arg7[%c0_15, %c0_16] : memref<1x128xf32, #tpu.memory_space<vmem>>, vector<1x128xf32>
    %18 = vector.broadcast %17 : vector<1x128xf32> to vector<16x128xf32>
    %19 = arith.addf %16, %18 : vector<16x128xf32>
    %cst_17 = arith.constant 0.000000e+00 : f32
    %20 = vector.broadcast %cst_17 : f32 to vector<16x128xf32>
    %21 = arith.maximumf %19, %20 : vector<16x128xf32>
    %c0_18 = arith.constant 0 : index
    %c0_19 = arith.constant 0 : index
    %22 = vector.load %arg8[%c0_18, %c0_19] : memref<16x128xf32, #tpu.memory_space<vmem>>, vector<16x128xf32>
    tpu.vector_store %arg8[%c0_18, %c0_19], %21 {strides = array<i32>} : memref<16x128xf32, #tpu.memory_space<vmem>>, vector<16x128xf32>,
    return
  }
  func.func @transform_0(%arg0: i32) -> (i32, i32) {
    %c0_i32 = arith.constant 0 : i32
    %c0_i32_0 = arith.constant 0 : i32
    return %arg0, %c0_i32 : i32, i32
  }
  func.func @transform_1(%arg0: i32) -> (i32, i32) {
    %c0_i32 = arith.constant 0 : i32
    %c0_i32_0 = arith.constant 0 : i32
    %c0_i32_1 = arith.constant 0 : i32
    return %c0_i32, %c0_i32_0 : i32, i32
  }
  func.func @transform_2(%arg0: i32) -> (i32, i32) {
    %c0_i32 = arith.constant 0 : i32
    %c0_i32_0 = arith.constant 0 : i32
    %c0_i32_1 = arith.constant 0 : i32
    return %c0_i32, %c0_i32_0 : i32, i32
  }
  func.func @transform_3(%arg0: i32) -> (i32, i32) {
    %c0_i32 = arith.constant 0 : i32
    %c0_i32_0 = arith.constant 0 : i32
    %c0_i32_1 = arith.constant 0 : i32
    return %c0_i32, %c0_i32_0 : i32, i32
  }
  func.func @transform_4(%arg0: i32) -> (i32, i32) {
    %c0_i32 = arith.constant 0 : i32
    %c0_i32_0 = arith.constant 0 : i32
    %c0_i32_1 = arith.constant 0 : i32
    return %c0_i32, %c0_i32_0 : i32, i32
  }
  func.func @transform_5(%arg0: i32) -> (i32, i32) {
    %c0_i32 = arith.constant 0 : i32
    %c0_i32_0 = arith.constant 0 : i32
    %c0_i32_1 = arith.constant 0 : i32
    return %c0_i32, %c0_i32_0 : i32, i32
  }
  func.func @transform_6(%arg0: i32) -> (i32, i32) {
    %c0_i32 = arith.constant 0 : i32
    %c0_i32_0 = arith.constant 0 : i32
    %c0_i32_1 = arith.constant 0 : i32
    return %c0_i32, %c0_i32_0 : i32, i32
  }
  func.func @transform_7(%arg0: i32) -> (i32, i32) {
    %c0_i32 = arith.constant 0 : i32
    %c0_i32_0 = arith.constant 0 : i32
    return %arg0, %c0_i32 : i32, i32
  }
}

</mosaic_0001>

<llo_original>
// kernel: tpu_custom_call.1
$region0: #{tpu_custom_call.1}
  #allocation0 [shape = 'u32[]', space=smem, size = 0x4, offset = 0x4, fixed_abs, tag = 'smem constant byte address 0x4 - core index']
  #allocation1 [shape = 'u32[144,128]{1,0:T(1,128)}', space=vmem, size = 0x12000, scoped, tag = 'internal scratch']
  %s0 = inlined_call_operand.vmem [shape: f32[16,32], index: 0, kind: input, shape index: {}]
  %s1 = inlined_call_operand.vmem [shape: f32[32,16], index: 1, kind: input, shape index: {}]
  %s2 = inlined_call_operand.vmem [shape: f32[1,16], index: 2, kind: input, shape index: {}]
  %s3 = inlined_call_operand.vmem [shape: f32[16,8], index: 3, kind: input, shape index: {}]
  %s4 = inlined_call_operand.vmem [shape: f32[1,8], index: 4, kind: input, shape index: {}]
  %s5 = inlined_call_operand.vmem [shape: f32[8,128], index: 5, kind: input, shape index: {}]
  %s6 = inlined_call_operand.vmem [shape: f32[1,128], index: 6, kind: input, shape index: {}]
  %s7 = inlined_call_operand.hbm [shape: f32[16,128], index: 7, kind: output, shape index: {}]
  %s8 = sld [smem:[#allocation0]]
  $region38: #{tpu_custom_call.1} parent=0
    _
  %s10 = ssub.s32 1, %s8
  %s11 = scalar_select 0, %s10, %s8
  $region1: #{tpu_custom_call.1} parent=0
    #allocation2 [shape = 'u8[8192]{0}', space=vmem, size = 0x2000, scoped, tag = 'output window, operand 0, single buffered']
    #allocation3 [shape = 's32[1]{0}', space=sflag, size = 0x4, scoped, tag = 'scoped memory for tpu_custom_call.1']
    %12 = vsyncpa [#allocation3], 0
    // Predicated region
    $region2: #{tpu_custom_call.1} parent=1 // pred_check
      _
    $region3: #{tpu_custom_call.1} parent=1 // pred_check_branch
      %14 = sbr.rel (0) target = $region5
    $region4: #{tpu_custom_call.1} parent=1 // pred_region
      _
    $region5: #{tpu_custom_call.1} parent=1 // pred_fallthru
      _
    // Predicated region
    $region6: #{tpu_custom_call.1} parent=1 // pred_check
      _
    $region7: #{tpu_custom_call.1} parent=1 // pred_check_branch
      %16 = sbr.rel (0) target = $region9
    $region8: #{tpu_custom_call.1} parent=1 // pred_region
      _
    $region9: #{tpu_custom_call.1} parent=1 // pred_fallthru
      _
    // Predicated region
    $region10: #{tpu_custom_call.1} parent=1 // pred_check
      _
    $region11: #{tpu_custom_call.1} parent=1 // pred_check_branch
      %18 = sbr.rel (0) target = $region13
    $region12: #{tpu_custom_call.1} parent=1 // pred_region
      _
    $region13: #{tpu_custom_call.1} parent=1 // pred_fallthru
      _
    // Predicated region
    $region14: #{tpu_custom_call.1} parent=1 // pred_check
      _
    $region15: #{tpu_custom_call.1} parent=1 // pred_check_branch
      %20 = sbr.rel (0) target = $region17
    $region16: #{tpu_custom_call.1} parent=1 // pred_region
      _
    $region17: #{tpu_custom_call.1} parent=1 // pred_fallthru
      _
    // Predicated region
    $region18: #{tpu_custom_call.1} parent=1 // pred_check
      _
    $region19: #{tpu_custom_call.1} parent=1 // pred_check_branch
      %22 = sbr.rel (0) target = $region21
    $region20: #{tpu_custom_call.1} parent=1 // pred_region
      _
    $region21: #{tpu_custom_call.1} parent=1 // pred_fallthru
      _
    // Predicated region
    $region22: #{tpu_custom_call.1} parent=1 // pred_check
      _
    $region23: #{tpu_custom_call.1} parent=1 // pred_check_branch
      %24 = sbr.rel (0) target = $region25
    $region24: #{tpu_custom_call.1} parent=1 // pred_region
      _
    $region25: #{tpu_custom_call.1} parent=1 // pred_fallthru
      _
    // Predicated region
    $region26: #{tpu_custom_call.1} parent=1 // pred_check
      _
    $region27: #{tpu_custom_call.1} parent=1 // pred_check_branch
      %26 = sbr.rel (0) target = $region29
    $region28: #{tpu_custom_call.1} parent=1 // pred_region
      _
    $region29: #{tpu_custom_call.1} parent=1 // pred_fallthru
      _
    %v27 = vld [vmem:[%s0] sm:$0xff]
    %v28 = vld [vmem:[%s0 + $0x8] sm:$0xff]
    %v29 = vld [vmem:[%s1] sm:$0xff]
    %v30 = vld [vmem:[%s1 + $0x8] sm:$0xff]
    %v31 = vld [vmem:[%s1 + $0x10] sm:$0xff]
    %v32 = vld [vmem:[%s1 + $0x18] sm:$0xff]
    %v33 = vld [vmem:[%s2] sm:$0x1]
    %v35 = vlaneseq
    %v36 = vshrl.u32 %v35, 7
    %v37 = vsub.s32 0, %v36
    %v38 = vrot.slane %v33, %v37
    %vm40 = vcmask 261120
    %v42 = vsel %vm40, %v27, 0
    %v45 = vsel %vm40, %v28, 0
    %47 = vmatprep.subr.mxu0 0.0
    %48 = vmatpush1.msra.mxu0 %v29
    %49 = vmatprep.subr.mxu0 0.0
    %50 = vmatpush1.msra.mxu0 %v30
    %51 = vmatprep.subr.mxu0 0.0
    %52 = vmatpush1.msra.mxu0 %v31
    %53 = vmatprep.subr.mxu0 0.0
    %54 = vmatpush1.msra.mxu0 %v32
    %55 = vmatprep.subr.mxu0 0.0
    %56 = vmatpush1.msra.mxu0 0.0
    %57 = vmatprep.subr.mxu0 0.0
    %58 = vmatpush1.msra.mxu0 0.0
    %59 = vmatprep.subr.mxu0 0.0
    %60 = vmatpush1.msra.mxu0 0.0
    %61 = vmatprep.subr.mxu0 0.0
    %62 = vmatpush1.msra.mxu0 0.0
    %63 = vmatprep.subr.mxu0 0.0
    %64 = vmatpush1.msra.mxu0 0.0
    %65 = vmatprep.subr.mxu0 0.0
    %66 = vmatpush1.msra.mxu0 0.0
    %67 = vmatprep.subr.mxu0 0.0
    %68 = vmatpush1.msra.mxu0 0.0
    %69 = vmatprep.subr.mxu0 0.0
    %70 = vmatpush1.msra.mxu0 0.0
    %71 = vmatprep.subr.mxu0 0.0
    %72 = vmatpush1.msra.mxu0 0.0
    %73 = vmatprep.subr.mxu0 0.0
    %74 = vmatpush1.msra.mxu0 0.0
    %75 = vmatprep.subr.mxu0 0.0
    %76 = vmatpush1.msra.mxu0 0.0
    %77 = vmatprep.subr.mxu0 0.0
    %78 = vmatpush1.msra.mxu0 0.0
    %79 = vmatprep.subr.mxu0 0.0
    %80 = vmatpush1.msra.mxu0 0.0
    %81 = vmatprep.subr.mxu0 0.0
    %82 = vmatpush1.msra.mxu0 0.0
    %83 = vmatprep.subr.mxu0 0.0
    %84 = vmatpush1.msra.mxu0 0.0
    %85 = vmatprep.subr.mxu0 0.0
    %86 = vmatpush1.msra.mxu0 0.0
    %87 = vmatprep.subr.mxu0 0.0
    %88 = vmatpush1.msra.mxu0 0.0
    %89 = vmatprep.subr.mxu0 0.0
    %90 = vmatpush1.msra.mxu0 0.0
    %91 = vmatprep.subr.mxu0 0.0
    %92 = vmatpush1.msra.mxu0 0.0
    %93 = vmatprep.subr.mxu0 0.0
    %94 = vmatpush1.msra.mxu0 0.0
    %95 = vmatprep.subr.mxu0 0.0
    %96 = vmatpush1.msra.mxu0 0.0
    %97 = vmatprep.subr.mxu0 0.0
    %98 = vmatpush1.msra.mxu0 0.0
    %99 = vmatprep.subr.mxu0 0.0
    %100 = vmatpush1.msra.mxu0 0.0
    %101 = vmatprep.subr.mxu0 0.0
    %102 = vmatpush1.msra.mxu0 0.0
    %103 = vmatprep.subr.mxu0 0.0
    %104 = vmatpush1.msra.mxu0 0.0
    %105 = vmatprep.subr.mxu0 0.0
    %106 = vmatpush1.msra.mxu0 0.0
    %107 = vmatprep.subr.mxu0 0.0
    %108 = vmatpush1.msra.mxu0 0.0
    %109 = vmatprep.subr.mxu0 0.0
    %110 = vmatpush1.msra.mxu0 0.0
    %111 = vmatprep.mubr.f32.mxu0 0.0
    %112 = vmatmul.mubr.f32.gmra.mrb[0].mxu0 %v42
    %v113 = vpop.f32.mrb[0].mxu0
    %v114 = vadd.f32 %v38, %v113
    %v115 = vpop.f32.mrb[0].mxu0
    %116 = vmatprep.mubr.f32.mxu0 0.0
    %117 = vmatmul.mubr.f32.gmra.mrb[0].mxu0 %v45
    %v118 = vpop.f32.mrb[0].mxu0
    %v119 = vadd.f32 %v38, %v118
    %v120 = vpop.f32.mrb[0].mxu0
    %121 = vdwg.mxu0
    %v122 = vmax.f32 %v114, 0.0
    %v123 = vmax.f32 %v119, 0.0
    %v124 = vld [vmem:[%s3] sm:$0xff]
    %v125 = vld [vmem:[%s3 + $0x8] sm:$0xff]
    %v126 = vld [vmem:[%s4] sm:$0x1]
    %v128 = vlaneseq
    %v129 = vshrl.u32 %v128, 7
    %v130 = vsub.s32 0, %v129
    %v131 = vrot.slane %v126, %v130
    %vm133 = vcmask 130048
    %v135 = vsel %vm133, %v122, 0
    %v138 = vsel %vm133, %v123, 0
    %140 = vmatprep.subr.mxu0 0.0
    %141 = vmatpush1.msra.mxu0 %v124
    %142 = vmatprep.subr.mxu0 0.0
    %143 = vmatpush1.msra.mxu0 %v125
    %144 = vmatprep.subr.mxu0 0.0
    %145 = vmatpush1.msra.mxu0 0.0
    %146 = vmatprep.subr.mxu0 0.0
    %147 = vmatpush1.msra.mxu0 0.0
    %148 = vmatprep.subr.mxu0 0.0
    %149 = vmatpush1.msra.mxu0 0.0
    %150 = vmatprep.subr.mxu0 0.0
    %151 = vmatpush1.msra.mxu0 0.0
    %152 = vmatprep.subr.mxu0 0.0
    %153 = vmatpush1.msra.mxu0 0.0
    %154 = vmatprep.subr.mxu0 0.0
    %155 = vmatpush1.msra.mxu0 0.0
    %156 = vmatprep.subr.mxu0 0.0
    %157 = vmatpush1.msra.mxu0 0.0
    %158 = vmatprep.subr.mxu0 0.0
    %159 = vmatpush1.msra.mxu0 0.0
    %160 = vmatprep.subr.mxu0 0.0
    %161 = vmatpush1.msra.mxu0 0.0
    %162 = vmatprep.subr.mxu0 0.0
    %163 = vmatpush1.msra.mxu0 0.0
    %164 = vmatprep.subr.mxu0 0.0
    %165 = vmatpush1.msra.mxu0 0.0
    %166 = vmatprep.subr.mxu0 0.0
    %167 = vmatpush1.msra.mxu0 0.0
    %168 = vmatprep.subr.mxu0 0.0
    %169 = vmatpush1.msra.mxu0 0.0
    %170 = vmatprep.subr.mxu0 0.0
    %171 = vmatpush1.msra.mxu0 0.0
    %172 = vmatprep.subr.mxu0 0.0
    %173 = vmatpush1.msra.mxu0 0.0
    %174 = vmatprep.subr.mxu0 0.0
    %175 = vmatpush1.msra.mxu0 0.0
    %176 = vmatprep.subr.mxu0 0.0
    %177 = vmatpush1.msra.mxu0 0.0
    %178 = vmatprep.subr.mxu0 0.0
    %179 = vmatpush1.msra.mxu0 0.0
    %180 = vmatprep.subr.mxu0 0.0
    %181 = vmatpush1.msra.mxu0 0.0
    %182 = vmatprep.subr.mxu0 0.0
    %183 = vmatpush1.msra.mxu0 0.0
    %184 = vmatprep.subr.mxu0 0.0
    %185 = vmatpush1.msra.mxu0 0.0
    %186 = vmatprep.subr.mxu0 0.0
    %187 = vmatpush1.msra.mxu0 0.0
    %188 = vmatprep.subr.mxu0 0.0
    %189 = vmatpush1.msra.mxu0 0.0
    %190 = vmatprep.subr.mxu0 0.0
    %191 = vmatpush1.msra.mxu0 0.0
    %192 = vmatprep.subr.mxu0 0.0
    %193 = vmatpush1.msra.mxu0 0.0
    %194 = vmatprep.subr.mxu0 0.0
    %195 = vmatpush1.msra.mxu0 0.0
    %196 = vmatprep.subr.mxu0 0.0
    %197 = vmatpush1.msra.mxu0 0.0
    %198 = vmatprep.subr.mxu0 0.0
    %199 = vmatpush1.msra.mxu0 0.0
    %200 = vmatprep.subr.mxu0 0.0
    %201 = vmatpush1.msra.mxu0 0.0
    %202 = vmatprep.subr.mxu0 0.0
    %203 = vmatpush1.msra.mxu0 0.0
    %204 = vmatprep.mubr.f32.mxu0 0.0
    %205 = vmatmul.mubr.f32.gmra.mrb[0].mxu0 %v135
    %v206 = vpop.f32.mrb[0].mxu0
    %v207 = vadd.f32 %v131, %v206
    %v208 = vpop.f32.mrb[0].mxu0
    %209 = vmatprep.mubr.f32.mxu0 0.0
    %210 = vmatmul.mubr.f32.gmra.mrb[0].mxu0 %v138
    %v211 = vpop.f32.mrb[0].mxu0
    %v212 = vadd.f32 %v131, %v211
    %v213 = vpop.f32.mrb[0].mxu0
    %214 = vdwg.mxu0
    %v215 = vmax.f32 %v207, 0.0
    %v216 = vmax.f32 %v212, 0.0
    %v217 = vld [vmem:[%s5] sm:$0xff]
    %v218 = vld [vmem:[%s6] sm:$0x1]
    %v220 = vlaneseq
    %v221 = vshrl.u32 %v220, 7
    %v222 = vsub.s32 0, %v221
    %v223 = vrot.slane %v218, %v222
    %vm225 = vcmask 64512
    %v227 = vsel %vm225, %v215, 0
    %v230 = vsel %vm225, %v216, 0
    %232 = vmatprep.subr.mxu0 0.0
    %233 = vmatpush1.msra.mxu0 %v217
    %234 = vmatprep.subr.mxu0 0.0
    %235 = vmatpush1.msra.mxu0 0.0
    %236 = vmatprep.subr.mxu0 0.0
    %237 = vmatpush1.msra.mxu0 0.0
    %238 = vmatprep.subr.mxu0 0.0
    %239 = vmatpush1.msra.mxu0 0.0
    %240 = vmatprep.subr.mxu0 0.0
    %241 = vmatpush1.msra.mxu0 0.0
    %242 = vmatprep.subr.mxu0 0.0
    %243 = vmatpush1.msra.mxu0 0.0
    %244 = vmatprep.subr.mxu0 0.0
    %245 = vmatpush1.msra.mxu0 0.0
    %246 = vmatprep.subr.mxu0 0.0
    %247 = vmatpush1.msra.mxu0 0.0
    %248 = vmatprep.subr.mxu0 0.0
    %249 = vmatpush1.msra.mxu0 0.0
    %250 = vmatprep.subr.mxu0 0.0
    %251 = vmatpush1.msra.mxu0 0.0
    %252 = vmatprep.subr.mxu0 0.0
    %253 = vmatpush1.msra.mxu0 0.0
    %254 = vmatprep.subr.mxu0 0.0
    %255 = vmatpush1.msra.mxu0 0.0
    %256 = vmatprep.subr.mxu0 0.0
    %257 = vmatpush1.msra.mxu0 0.0
    %258 = vmatprep.subr.mxu0 0.0
    %259 = vmatpush1.msra.mxu0 0.0
    %260 = vmatprep.subr.mxu0 0.0
    %261 = vmatpush1.msra.mxu0 0.0
    %262 = vmatprep.subr.mxu0 0.0
    %263 = vmatpush1.msra.mxu0 0.0
    %264 = vmatprep.subr.mxu0 0.0
    %265 = vmatpush1.msra.mxu0 0.0
    %266 = vmatprep.subr.mxu0 0.0
    %267 = vmatpush1.msra.mxu0 0.0
    %268 = vmatprep.subr.mxu0 0.0
    %269 = vmatpush1.msra.mxu0 0.0
    %270 = vmatprep.subr.mxu0 0.0
    %271 = vmatpush1.msra.mxu0 0.0
    %272 = vmatprep.subr.mxu0 0.0
    %273 = vmatpush1.msra.mxu0 0.0
    %274 = vmatprep.subr.mxu0 0.0
    %275 = vmatpush1.msra.mxu0 0.0
    %276 = vmatprep.subr.mxu0 0.0
    %277 = vmatpush1.msra.mxu0 0.0
    %278 = vmatprep.subr.mxu0 0.0
    %279 = vmatpush1.msra.mxu0 0.0
    %280 = vmatprep.subr.mxu0 0.0
    %281 = vmatpush1.msra.mxu0 0.0
    %282 = vmatprep.subr.mxu0 0.0
    %283 = vmatpush1.msra.mxu0 0.0
    %284 = vmatprep.subr.mxu0 0.0
    %285 = vmatpush1.msra.mxu0 0.0
    %286 = vmatprep.subr.mxu0 0.0
    %287 = vmatpush1.msra.mxu0 0.0
    %288 = vmatprep.subr.mxu0 0.0
    %289 = vmatpush1.msra.mxu0 0.0
    %290 = vmatprep.subr.mxu0 0.0
    %291 = vmatpush1.msra.mxu0 0.0
    %292 = vmatprep.subr.mxu0 0.0
    %293 = vmatpush1.msra.mxu0 0.0
    %294 = vmatprep.subr.mxu0 0.0
    %295 = vmatpush1.msra.mxu0 0.0
    %296 = vmatprep.mubr.f32.mxu0 0.0
    %297 = vmatmul.mubr.f32.gmra.mrb[0].mxu0 %v227
    %v298 = vpop.f32.mrb[0].mxu0
    %v299 = vadd.f32 %v223, %v298
    %v300 = vpop.f32.mrb[0].mxu0
    %301 = vmatprep.mubr.f32.mxu0 0.0
    %302 = vmatmul.mubr.f32.gmra.mrb[0].mxu0 %v230
    %v303 = vpop.f32.mrb[0].mxu0
    %v304 = vadd.f32 %v223, %v303
    %v305 = vpop.f32.mrb[0].mxu0
    %306 = vdwg.mxu0
    %v307 = vmax.f32 %v299, 0.0
    %v308 = vmax.f32 %v304, 0.0
    %309 = vst [vmem:[#allocation2] sm:$0xff] %v307
    %310 = vst [vmem:[#allocation2 + $0x8] sm:$0xff] %v308
    // Predicated region
    $region30: #{tpu_custom_call.1} parent=1 // pred_check
      _
    $region31: #{tpu_custom_call.1} parent=1 // pred_check_branch
      %312 = sbr.rel (0) target = $region33
    $region32: #{tpu_custom_call.1} parent=1 // pred_region
      %s314 = ssub.s32 256, 256
      %315 = vsyncadd [#allocation3], %s314
      %s316 = sshll.u32 [#allocation2], 4
      %s317 = int_to_ptr.vmem [resolvable:$true] %s316
      %322 = dma.vmem_to_hbm [thread:$0]  %s317, 256, %s7, [#allocation3], 128, 128, 8
    $region33: #{tpu_custom_call.1} parent=1 // pred_fallthru
      _
    // Predicated region
    $region34: #{tpu_custom_call.1} parent=1 // pred_check
      _
    $region35: #{tpu_custom_call.1} parent=1 // pred_check_branch
      %324 = sbr.rel (0) target = $region37
    $region36: #{tpu_custom_call.1} parent=1 // pred_region
      %325 = dma.done [#allocation3], 256
    $region37: #{tpu_custom_call.1} parent=1 // pred_fallthru
      _
    %326 = vsyncpa [#allocation3], 1

</llo_original>
